<compile_context>
chip_gen: v7x
topology: tpu7x:2x2x1
jax: 0.10.0
libtpu: 0.0.40
codegen_flags: <defaults>
</compile_context>

<pallas_src>
import jax
import jax.numpy as jnp
from jax.experimental import pallas as pl
from jax.experimental.pallas import tpu as pltpu


def _round_up(x: int, m: int) -> int:
    return (x + m - 1) // m * m


def _cdiv(a: int, b: int) -> int:
    return (a + b - 1) // b


def attention_kernel(inp_ref, c_ref, mb_ref, w_ctx_ref, b_ctx_ref, v_ref,
                     hid_ref, alpha_ref):
    """TB batch rows per grid step; all contractions on the MXU, f32 accumulate.

    inp_ref:   (TB, 1, Hp) f32  input_linear(x) precomputed in the wrapper
    c_ref:     (TB, Sp, Ip) mm  attention context (mm = bf16 default / f32)
    mb_ref:    (TB, 1, Sp) f32  additive mask bias (0 free / -inf masked & S pad)
    w_ctx_ref: (Ip, Hp) mm      Conv1d(k=1) weight          (VMEM-resident)
    b_ctx_ref: (1, Hp) f32      Conv1d(k=1) bias            (VMEM-resident)
    v_ref:     (1, Hp) mm       parameter V                 (VMEM-resident)
    hid_ref:   (TB, 1, Hp) f32  attentioned hidden state (output)
    alpha_ref: (TB, 1, Sp) f32  attention weights (output)
    """
    f32 = jnp.float32
    TB, Sp, Ip = c_ref.shape
    Hp = w_ctx_ref.shape[1]
    mm = c_ref.dtype  # MXU operand / tanh dtype (pass float32 on v5e)

    # ctx = context_linear(context): one (TB*Sp, Ip) @ (Ip, Hp) MXU matmul
    # (M = TB*Sp keeps the systolic array full; accumulate in f32).
    c2 = c_ref[...].reshape(TB * Sp, Ip)
    ctx = jnp.dot(c2, w_ctx_ref[...], preferred_element_type=f32)
    ctx = ctx.reshape(TB, Sp, Hp) + b_ctx_ref[...]                    # (TB,Sp,Hp) f32

    # tanh(inp + ctx) on the EUP, computed in the matmul dtype (bf16 halves EUP
    # work and the held tile on v6e/v7x; use matmul_dtype=float32 on v5e).
    t = jnp.tanh((inp_ref[...] + ctx).astype(mm))                     # (TB,Sp,Hp) mm

    # att[b,s] = sum_h V[h] * t[b,s,h]: batched trans-B matmul on the MXU
    # (no XLU transpose / cross-lane reduce of the (Sp,Hp) tile).
    vb = jnp.broadcast_to(v_ref[...][None], (TB, 1, Hp))              # (TB,1,Hp) mm
    att = jnp.einsum('bqh,bsh->bqs', vb, t,
                     preferred_element_type=f32)                      # (TB,1,Sp) f32
    att = att + mb_ref[...]             # masked & padded positions -> -inf

    # Softmax over the sequence (lane) axis; exact divide (cheap on (TB,1,Sp)).
    amax = jnp.max(att, axis=-1, keepdims=True)
    e = jnp.exp(att - amax)
    alpha = e / jnp.sum(e, axis=-1, keepdims=True)                    # (TB,1,Sp) f32
    alpha_ref[...] = alpha.astype(alpha_ref.dtype)

    # hidden = bmm(ctx_(H,S), alpha): batched (1,Sp)@(Sp,Hp) matmuls on the MXU
    # with bf16 operands (f32 accumulate).
    hid = jnp.einsum('bqs,bsh->bqh', alpha.astype(mm), ctx.astype(mm),
                     preferred_element_type=f32)                      # (TB,1,Hp) f32
    hid_ref[...] = hid.astype(hid_ref.dtype)


def attention_forward(x, context, mask, w_in, b_in, w_ctx, b_ctx, v,
                      *, matmul_dtype=jnp.bfloat16, batch_tile=8,
                      vmem_limit_bytes=64 * 1024 * 1024):
    """Pointer-Net attention forward.

    x: (B, I)   context: (B, S, I)   mask: (B, S) bool (True == masked -> -inf)
    w_in/w_ctx: (I, H)   b_in/b_ctx: (H,)   v: (H,)

    matmul_dtype: operand dtype for context / w_ctx / V / tanh fed to the MXU.
        Default bfloat16 (full-rate MXU + half the HBM read of context on
        v5e/v6e/v7x).  Pass jnp.float32 explicitly for f32-exact alpha/hidden
        (recommended on v5e, whose VPU/EUP has no bf16 path).  Accumulation and
        the softmax are always float32.
    batch_tile: batch rows per grid step.
    Returns (hidden (B, H), alpha (B, S)) in float32.
    """
    B, S, I = context.shape
    H = w_in.shape[1]
    f32 = jnp.float32
    mm = jnp.dtype(matmul_dtype)

    # ---- batch tiling --------------------------------------------------------
    TB = max(1, min(int(batch_tile), B))
    # Keep >= 2 grid steps when possible so dimension_semantics=("parallel",)
    # can shard work across v7x's 2 TensorCores (irrelevant on v5e/v6e).
    if B >= 2 and _cdiv(B, TB) < 2:
        TB = _cdiv(B, 2)
    Bp = _round_up(B, TB)

    # ---- padding: I (contraction lane dim) -> x128, H -> x128, S -> x8 only.
    # The padded S tail / batch tail is handled by the -inf mask bias; we do NOT
    # materialize a (B, S128, I128) copy of context in HBM.
    Ip = _round_up(I, 128)
    Hp = _round_up(H, 128)
    Sp = _round_up(S, 8)

    if (Bp, Sp, Ip) == (B, S, I):
        c_p = context.astype(mm)
    else:
        c_p = jnp.zeros((Bp, Sp, Ip), mm).at[:B, :S, :I].set(context.astype(mm))

    # Hoisted input Linear: one XLA (B,I)@(I,H) matmul in f32; removes a per-step
    # M=1 MXU matmul and the resident (Ip,Hp) W_in tile from VMEM.
    inp = x.astype(f32) @ w_in.astype(f32) + b_in.astype(f32)[None, :]   # (B, H)
    inp_p = jnp.zeros((Bp, 1, Hp), f32).at[:B, 0, :H].set(inp)

    if (Ip, Hp) == (I, H):
        w_ctx_p = w_ctx.astype(mm)
    else:
        w_ctx_p = jnp.zeros((Ip, Hp), mm).at[:I, :H].set(w_ctx.astype(mm))
    b_ctx_p = jnp.zeros((1, Hp), f32).at[0, :H].set(b_ctx.astype(f32))
    v_p = jnp.zeros((1, Hp), mm).at[0, :H].set(v.astype(mm))

    # Additive mask bias: -inf on masked positions AND on the padded S tail
    # (matches PyTorch `att[mask] = -inf`; a fully-masked row yields NaN exactly
    # like torch softmax over all -inf).  Padded batch rows stay finite.
    neg = jnp.float32(-jnp.inf)
    mb = jnp.full((Bp, 1, Sp), neg, f32)
    mb = mb.at[:B, 0, :S].set(jnp.where(mask, neg, jnp.float32(0.0)))
    if Bp > B:
        mb = mb.at[B:, 0, :S].set(0.0)

    grid = (Bp // TB,)

    hid_p, alpha_p = pl.pallas_call(
        attention_kernel,
        out_shape=(jax.ShapeDtypeStruct((Bp, 1, Hp), f32),
                   jax.ShapeDtypeStruct((Bp, 1, Sp), f32)),
        grid=grid,
        in_specs=[
            pl.BlockSpec((TB, 1, Hp), lambda b: (b, 0, 0)),   # inp (hoisted Linear)
            pl.BlockSpec((TB, Sp, Ip), lambda b: (b, 0, 0)),  # context (pipelined)
            pl.BlockSpec((TB, 1, Sp), lambda b: (b, 0, 0)),   # mask bias
            pl.BlockSpec((Ip, Hp), lambda b: (0, 0)),         # w_ctx (VMEM-resident)
            pl.BlockSpec((1, Hp), lambda b: (0, 0)),          # b_ctx (VMEM-resident)
            pl.BlockSpec((1, Hp), lambda b: (0, 0)),          # V     (VMEM-resident)
        ],
        out_specs=(
            pl.BlockSpec((TB, 1, Hp), lambda b: (b, 0, 0)),   # hidden
            pl.BlockSpec((TB, 1, Sp), lambda b: (b, 0, 0)),   # alpha
        ),
        compiler_params=pltpu.CompilerParams(
            dimension_semantics=("parallel",),
            vmem_limit_bytes=vmem_limit_bytes),
    )(inp_p, c_p, mb, w_ctx_p, b_ctx_p, v_p)

    hidden = hid_p[:B, 0, :H]
    alpha = alpha_p[:B, 0, :S]
    return hidden, alpha


def reference_forward(x, context, mask, w_in, b_in, w_ctx, b_ctx, v):
    """Pure-JAX reference mirroring the PyTorch module."""
    inp = x @ w_in + b_in                                        # (B, H)
    ctx = jnp.einsum('bsi,ih->bsh', context, w_ctx) + b_ctx      # (B, S, H)
    att = jnp.sum(jnp.tanh(inp[:, None, :] + ctx) * v[None, None, :], axis=-1)
    att = jnp.where(mask, -jnp.inf, att)
    alpha = jax.nn.softmax(att, axis=-1)
    hidden = jnp.einsum('bsh,bs->bh', ctx, alpha)
    return hidden, alpha


if __name__ == "__main__":
    B, S, INPUT_DIM, HIDDEN_DIM = 2, 8, 32, 32

    key = jax.random.PRNGKey(0)
    k_x, k_c, k_win, k_bin, k_wctx, k_bctx, k_v = jax.random.split(key, 7)

    x = jax.random.normal(k_x, (B, INPUT_DIM), dtype=jnp.float32)
    context = jax.random.normal(k_c, (B, S, INPUT_DIM), dtype=jnp.float32)
    # True == masked -> -inf (keep at least one unmasked position per row).
    mask = jnp.zeros((B, S), dtype=bool).at[:, -2:].set(True)

    # Deterministic parameter init (shapes from the module __init__).
    bound = 1.0 / (INPUT_DIM ** 0.5)
    w_in = jax.random.uniform(k_win, (INPUT_DIM, HIDDEN_DIM), jnp.float32, -bound, bound)
    b_in = jax.random.uniform(k_bin, (HIDDEN_DIM,), jnp.float32, -bound, bound)
    w_ctx = jax.random.uniform(k_wctx, (INPUT_DIM, HIDDEN_DIM), jnp.float32, -bound, bound)
    b_ctx = jax.random.uniform(k_bctx, (HIDDEN_DIM,), jnp.float32, -bound, bound)
    v = jax.random.uniform(k_v, (HIDDEN_DIM,), jnp.float32, -1.0, 1.0)  # nn.init.uniform(V,-1,1)

    # --- float32 path (explicit opt-in; bit-faithful module semantics) -------
    hidden, alpha = attention_forward(x, context, mask, w_in, b_in, w_ctx, b_ctx, v,
                                      matmul_dtype=jnp.float32)
    jax.block_until_ready((hidden, alpha))

    hidden_r, alpha_r = reference_forward(x, context, mask, w_in, b_in, w_ctx, b_ctx, v)
    assert jnp.allclose(hidden, hidden_r, atol=1e-2, rtol=1e-2)
    assert jnp.allclose(alpha, alpha_r, atol=1e-2, rtol=1e-2)
    assert bool(jnp.all(jnp.abs(jnp.sum(alpha, axis=-1) - 1.0) < 1e-3))
    assert bool(jnp.all(alpha[:, -2:] == 0.0))   # masked positions get zero weight

    # --- default bf16-MXU path (production setting for v5e/v6e/v7x MXU) ------
    hidden_bf, alpha_bf = attention_forward(x, context, mask, w_in, b_in, w_ctx, b_ctx, v)
    jax.block_until_ready((hidden_bf, alpha_bf))

    def _rt(a):  # bf16 round-trip -> like-for-like reference for the bf16 path
        return a.astype(jnp.bfloat16).astype(jnp.float32)

    hidden_rbf, alpha_rbf = reference_forward(
        x, _rt(context), mask, w_in, b_in, _rt(w_ctx), b_ctx, _rt(v))
    assert jnp.allclose(hidden_bf, hidden_rbf, atol=3e-2, rtol=3e-2)
    assert jnp.allclose(alpha_bf, alpha_rbf, atol=3e-2, rtol=3e-2)

    print("KERNEL_OK")
</pallas_src>

<mosaic_0001>
module attributes {stable_mosaic.version = 11 : i64} {
  func.func @attention_kernel(%arg0: i32, %arg1: memref<1x1x128xf32, #tpu.memory_space<vmem>>, %arg2: memref<1x8x128xf32, #tpu.memory_space<vmem>>, %arg3: memref<1x1x8xf32, #tpu.memory_space<vmem>>, %arg4: memref<128x128xf32, #tpu.memory_space<vmem>>, %arg5: memref<1x128xf32, #tpu.memory_space<vmem>>, %arg6: memref<1x128xf32, #tpu.memory_space<vmem>>, %arg7: memref<1x1x128xf32, #tpu.memory_space<vmem>>, %arg8: memref<1x1x8xf32, #tpu.memory_space<vmem>>) attributes {dimension_semantics = [#tpu.dimension_semantics<parallel>], iteration_bounds = array<i64: 2>, scalar_prefetch = 0 : i64, scratch_operands = 0 : i64, tpu.core_type = #tpu.core_type<tc>, window_params = [{transform_indices = @transform_0, window_bounds = array<i64: 1, 1, 128>}, {transform_indices = @transform_1, window_bounds = array<i64: 1, 8, 128>}, {transform_indices = @transform_2, window_bounds = array<i64: 1, 1, 8>}, {pipeline_mode = #tpu.pipeline_mode<synchronous>, transform_indices = @transform_3, window_bounds = array<i64: 128, 128>}, {pipeline_mode = #tpu.pipeline_mode<synchronous>, transform_indices = @transform_4, window_bounds = array<i64: 1, 128>}, {pipeline_mode = #tpu.pipeline_mode<synchronous>, transform_indices = @transform_5, window_bounds = array<i64: 1, 128>}, {transform_indices = @transform_6, window_bounds = array<i64: 1, 1, 128>}, {transform_indices = @transform_7, window_bounds = array<i64: 1, 1, 8>}]} {
    %c0 = arith.constant 0 : index
    %c0_0 = arith.constant 0 : index
    %c0_1 = arith.constant 0 : index
    %0 = vector.load %arg2[%c0, %c0_0, %c0_1] : memref<1x8x128xf32, #tpu.memory_space<vmem>>, vector<1x8x128xf32>
    %1 = vector.shape_cast %0 : vector<1x8x128xf32> to vector<8x128xf32>
    %c0_2 = arith.constant 0 : index
    %c0_3 = arith.constant 0 : index
    %2 = vector.load %arg4[%c0_2, %c0_3] : memref<128x128xf32, #tpu.memory_space<vmem>>, vector<128x128xf32>
    %cst = arith.constant dense<0.000000e+00> : vector<8x128xf32>
    %3 = tpu.matmul %1, %2, %cst {dimension_numbers = #tpu.dot_dimension_numbers<[1], [0], [0], [1], [0, 0, 1, 1], [], []>} : vector<8x128xf32>, vector<128x128xf32>, vector<8x128xf32> -> vector<8x128xf32>
    %4 = vector.shape_cast %3 : vector<8x128xf32> to vector<1x8x128xf32>
    %c0_4 = arith.constant 0 : index
    %c0_5 = arith.constant 0 : index
    %5 = vector.load %arg5[%c0_4, %c0_5] : memref<1x128xf32, #tpu.memory_space<vmem>>, vector<1x128xf32>
    %6 = vector.shape_cast %5 : vector<1x128xf32> to vector<1x1x128xf32>
    %7 = vector.broadcast %6 : vector<1x1x128xf32> to vector<1x8x128xf32>
    %8 = arith.addf %4, %7 : vector<1x8x128xf32>
    %c0_6 = arith.constant 0 : index
    %c0_7 = arith.constant 0 : index
    %c0_8 = arith.constant 0 : index
    %9 = vector.load %arg1[%c0_6, %c0_7, %c0_8] : memref<1x1x128xf32, #tpu.memory_space<vmem>>, vector<1x1x128xf32>
    %10 = vector.broadcast %9 : vector<1x1x128xf32> to vector<1x8x128xf32>
    %11 = arith.addf %10, %8 : vector<1x8x128xf32>
    %12 = math.tanh %11 : vector<1x8x128xf32>
    %c0_9 = arith.constant 0 : index
    %c0_10 = arith.constant 0 : index
    %13 = vector.load %arg6[%c0_9, %c0_10] : memref<1x128xf32, #tpu.memory_space<vmem>>, vector<1x128xf32>
    %14 = vector.shape_cast %13 : vector<1x128xf32> to vector<1x1x128xf32>
    "tpu.trace_start"() <{level = 10 : i32, message = "bqh,bsh->bqs"}> : () -> ()
    %cst_11 = arith.constant dense<0.000000e+00> : vector<1x1x8xf32>
    %15 = tpu.matmul %14, %12, %cst_11 {dimension_numbers = #tpu.dot_dimension_numbers<[2], [2], [1], [1], [0, 0, 0, 1, 1, 1], [0], [0]>} : vector<1x1x128xf32>, vector<1x8x128xf32>, vector<1x1x8xf32> -> vector<1x1x8xf32>
    "tpu.trace_stop"() : () -> ()
    %c0_12 = arith.constant 0 : index
    %c0_13 = arith.constant 0 : index
    %c0_14 = arith.constant 0 : index
    %16 = vector.load %arg3[%c0_12, %c0_13, %c0_14] : memref<1x1x8xf32, #tpu.memory_space<vmem>>, vector<1x1x8xf32>
    %17 = arith.addf %15, %16 : vector<1x1x8xf32>
    %cst_15 = arith.constant dense<0xFF800000> : vector<1x1xf32>
    %18 = vector.multi_reduction <maximumf>, %17, %cst_15 [2] : vector<1x1x8xf32> to vector<1x1xf32>
    %19 = vector.shape_cast %18 : vector<1x1xf32> to vector<1x1x1xf32>
    %20 = vector.broadcast %19 : vector<1x1x1xf32> to vector<1x1x8xf32>
    %21 = arith.subf %17, %20 : vector<1x1x8xf32>
    %22 = math.exp %21 : vector<1x1x8xf32>
    %cst_16 = arith.constant dense<0.000000e+00> : vector<1x1xf32>
    %23 = vector.multi_reduction <add>, %22, %cst_16 [2] : vector<1x1x8xf32> to vector<1x1xf32>
    %24 = vector.shape_cast %23 : vector<1x1xf32> to vector<1x1x1xf32>
    %25 = vector.broadcast %24 : vector<1x1x1xf32> to vector<1x1x8xf32>
    %26 = arith.divf %22, %25 : vector<1x1x8xf32>
    %c0_17 = arith.constant 0 : index
    %c0_18 = arith.constant 0 : index
    %c0_19 = arith.constant 0 : index
    %27 = vector.load %arg8[%c0_17, %c0_18, %c0_19] : memref<1x1x8xf32, #tpu.memory_space<vmem>>, vector<1x1x8xf32>
    tpu.vector_store %arg8[%c0_17, %c0_18, %c0_19], %26 {strides = array<i32>} : memref<1x1x8xf32, #tpu.memory_space<vmem>>, vector<1x1x8xf32>,
    "tpu.trace_start"() <{level = 10 : i32, message = "bqs,bsh->bqh"}> : () -> ()
    %cst_20 = arith.constant dense<0.000000e+00> : vector<1x1x128xf32>
    %28 = tpu.matmul %26, %8, %cst_20 {dimension_numbers = #tpu.dot_dimension_numbers<[2], [1], [1], [2], [0, 0, 0, 1, 1, 2], [0], [0]>} : vector<1x1x8xf32>, vector<1x8x128xf32>, vector<1x1x128xf32> -> vector<1x1x128xf32>
    "tpu.trace_stop"() : () -> ()
    %c0_21 = arith.constant 0 : index
    %c0_22 = arith.constant 0 : index
    %c0_23 = arith.constant 0 : index
    %29 = vector.load %arg7[%c0_21, %c0_22, %c0_23] : memref<1x1x128xf32, #tpu.memory_space<vmem>>, vector<1x1x128xf32>
    tpu.vector_store %arg7[%c0_21, %c0_22, %c0_23], %28 {strides = array<i32>} : memref<1x1x128xf32, #tpu.memory_space<vmem>>, vector<1x1x128xf32>,
    return
  }
  func.func @transform_0(%arg0: i32) -> (i32, i32, i32) {
    %c0_i32 = arith.constant 0 : i32
    %c0_i32_0 = arith.constant 0 : i32
    %c0_i32_1 = arith.constant 0 : i32
    return %arg0, %c0_i32, %c0_i32_0 : i32, i32, i32
  }
  func.func @transform_1(%arg0: i32) -> (i32, i32, i32) {
    %c0_i32 = arith.constant 0 : i32
    %c0_i32_0 = arith.constant 0 : i32
    %c0_i32_1 = arith.constant 0 : i32
    return %arg0, %c0_i32, %c0_i32_0 : i32, i32, i32
  }
  func.func @transform_2(%arg0: i32) -> (i32, i32, i32) {
    %c0_i32 = arith.constant 0 : i32
    %c0_i32_0 = arith.constant 0 : i32
    %c0_i32_1 = arith.constant 0 : i32
    return %arg0, %c0_i32, %c0_i32_0 : i32, i32, i32
  }
  func.func @transform_3(%arg0: i32) -> (i32, i32) {
    %c0_i32 = arith.constant 0 : i32
    %c0_i32_0 = arith.constant 0 : i32
    %c0_i32_1 = arith.constant 0 : i32
    return %c0_i32, %c0_i32_0 : i32, i32
  }
  func.func @transform_4(%arg0: i32) -> (i32, i32) {
    %c0_i32 = arith.constant 0 : i32
    %c0_i32_0 = arith.constant 0 : i32
    %c0_i32_1 = arith.constant 0 : i32
    return %c0_i32, %c0_i32_0 : i32, i32
  }
  func.func @transform_5(%arg0: i32) -> (i32, i32) {
    %c0_i32 = arith.constant 0 : i32
    %c0_i32_0 = arith.constant 0 : i32
    %c0_i32_1 = arith.constant 0 : i32
    return %c0_i32, %c0_i32_0 : i32, i32
  }
  func.func @transform_6(%arg0: i32) -> (i32, i32, i32) {
    %c0_i32 = arith.constant 0 : i32
    %c0_i32_0 = arith.constant 0 : i32
    %c0_i32_1 = arith.constant 0 : i32
    return %arg0, %c0_i32, %c0_i32_0 : i32, i32, i32
  }
  func.func @transform_7(%arg0: i32) -> (i32, i32, i32) {
    %c0_i32 = arith.constant 0 : i32
    %c0_i32_0 = arith.constant 0 : i32
    %c0_i32_1 = arith.constant 0 : i32
    return %arg0, %c0_i32, %c0_i32_0 : i32, i32, i32
  }
}

</mosaic_0001>

<llo_original>
// kernel: tpu_custom_call.1
$region0: #{tpu_custom_call.1}
  #allocation0 [shape = 'u32[]', space=smem, size = 0x4, offset = 0x4, fixed_abs, tag = 'smem constant byte address 0x4 - core index']
  #allocation1 [shape = 'u32[144,128]{1,0:T(1,128)}', space=vmem, size = 0x12000, scoped, tag = 'internal scratch']
  %s0 = inlined_call_operand.hbm [shape: f32[2,1,128], index: 0, kind: input, shape index: {}]
  %s1 = inlined_call_operand.hbm [shape: f32[2,8,128], index: 1, kind: input, shape index: {}]
  %s2 = inlined_call_operand.hbm [shape: f32[2,1,8], index: 2, kind: input, shape index: {}]
  %s3 = inlined_call_operand.hbm [shape: f32[128,128], index: 3, kind: input, shape index: {}]
  %s4 = inlined_call_operand.hbm [shape: f32[1,128], index: 4, kind: input, shape index: {}]
  %s5 = inlined_call_operand.hbm [shape: f32[1,128], index: 5, kind: input, shape index: {}]
  %s6 = inlined_call_operand.hbm [shape: f32[2,1,128], index: 6, kind: output, shape index: {0}]
  %s7 = inlined_call_operand.hbm [shape: f32[2,1,8], index: 7, kind: output, shape index: {1}]
  %8 = xla_tuple %s6, %s7
  %s9 = sld [smem:[#allocation0]]
  $region89: #{tpu_custom_call.1} parent=0
    _
  %s11 = ssub.s32 1, %s9
  %s12 = scalar_select 0, %s11, %s9
  $region1: #{tpu_custom_call.1} parent=0
    #allocation2 [shape = 'u8[1024]{0}', space=vmem, size = 0x400, scoped, tag = 'input window, operand 0']
    #allocation3 [shape = 's32[2]{0}', space=sflag, size = 0x8, scoped, tag = 'scoped memory for tpu_custom_call.1']
    #allocation4 [shape = 's32[2]{0}', space=sflag, size = 0x8, scoped, tag = 'scoped memory for tpu_custom_call.1']
    #allocation5 [shape = 'u8[8192]{0}', space=vmem, size = 0x2000, scoped, tag = 'input window, operand 1']
    #allocation6 [shape = 's32[2]{0}', space=sflag, size = 0x8, scoped, tag = 'scoped memory for tpu_custom_call.1']
    #allocation7 [shape = 'u8[1024]{0}', space=vmem, size = 0x400, scoped, tag = 'input window, operand 2']
    #allocation8 [shape = 'u8[65536]{0}', space=vmem, size = 0x10000, scoped, tag = 'input window, operand 3, single buffered']
    #allocation9 [shape = 's32[1]{0}', space=sflag, size = 0x4, scoped, tag = 'scoped memory for tpu_custom_call.1']
    #allocation10 [shape = 'u8[512]{0}', space=vmem, size = 0x400, scoped, tag = 'input window, operand 4, single buffered']
    #allocation11 [shape = 'u8[512]{0}', space=vmem, size = 0x400, scoped, tag = 'input window, operand 5, single buffered']
    #allocation12 [shape = 's32[1]{0}', space=sflag, size = 0x4, scoped, tag = 'scoped memory for tpu_custom_call.1']
    #allocation13 [shape = 'u8[1024]{0}', space=vmem, size = 0x400, scoped, tag = 'output window, operand 0']
    #allocation14 [shape = 'u8[1024]{0}', space=vmem, size = 0x400, scoped, tag = 'output window, operand 1']
    #allocation15 [shape = 's32[2]{0}', space=sflag, size = 0x8, scoped, tag = 'scoped memory for tpu_custom_call.1']
    %13 = vsyncpa [#allocation3], 0
    %s14 = scalar_lea.sflag [#allocation3], 1
    %15 = vsyncpa %s14, 0
    %16 = vsyncpa [#allocation6], 0
    %s17 = scalar_lea.sflag [#allocation6], 1
    %18 = vsyncpa %s17, 0
    %19 = vsyncpa [#allocation9], 0
    %20 = vsyncpa [#allocation12], 0
    %21 = vsyncpa [#allocation4], 0
    %s22 = scalar_lea.sflag [#allocation4], 1
    %23 = vsyncpa %s22, 0
    %24 = vsyncpa [#allocation15], 0
    %s25 = scalar_lea.sflag [#allocation15], 1
    %26 = vsyncpa %s25, 0
    loop: start=0, step=1, limit=4
    $region2: #{tpu_custom_call.1} parent=1 // loop_pre_header
      _
    $region3: #{tpu_custom_call.1} parent=1 // loop_header
      %s28 = sphi 0, %s32
      %p29 = scmp.ge.s32.totalorder %s28, 4
      %s38 = sphi 0, %s40
      %s41 = sphi 0, %s38
      %s42 = sphi 0, %s41
      %s58 = sphi 0, %s42
      %s64 = sphi 0, %s66
      %s67 = sphi 0, %s64
      %s68 = sphi 0, %s67
      %s84 = sphi 0, %s68
      %s90 = sphi 0, %s92
      %s93 = sphi 0, %s90
      %s94 = sphi 0, %s93
      %s110 = sphi 0, %s94
      %s114 = sphi 0, %s114
      %s116 = sphi 0, %s114
      %s117 = sphi 0, %s116
      %s131 = sphi 0, %s117
      %s135 = sphi 0, %s135
      %s137 = sphi 0, %s135
      %s138 = sphi 0, %s137
      %s152 = sphi 0, %s138
      %s156 = sphi 0, %s156
      %s158 = sphi 0, %s156
      %s159 = sphi 0, %s158
      %s173 = sphi 0, %s159
      %s179 = sphi 0, %s181
      %s182 = sphi 0, %s179
      %s183 = sphi 0, %s182
      %s199 = sphi 0, %s183
      %s205 = sphi 0, %s207
      %s208 = sphi 0, %s205
      %s209 = sphi 0, %s208
      %s225 = sphi 0, %s209
    $region4: #{tpu_custom_call.1} parent=1 // loop_header_branch
      %31 = sbr.rel (%p29) target = $region8
    $region5: #{tpu_custom_call.1} parent=1 // loop_body
      %s33 = ssub.s32 %s28, 1
      %s34 = ssub.s32 %s28, 2
      %s35 = sadd.s32 %s28, 1
      %s36 = ssub.s32 %s28, %s35
      %p37 = scmp.eq.s32.totalorder %s36, 0
      %s39 = sadd.s32 %s38, 1
      %s40 = scalar_select %p37, %s38, %s39
      %p43 = pneg %p37
      %p44 = scmp.eq.s32.totalorder %s28, 1
      %p45 = por %p43, %p44
      %p46 = scmp.ne.s32.totalorder %s38, %s41
      %p47 = scmp.eq.s32.totalorder %s28, 0
      %p48 = por %p46, %p47
      %p49 = scmp.ne.s32.totalorder %s38, %s41
      %p50 = scmp.eq.s32.totalorder %s33, 1
      %p51 = por %p49, %p50
      %p52 = scmp.ne.s32.totalorder %s41, %s42
      %p53 = scmp.eq.s32.totalorder %s33, 0
      %p54 = por %p52, %p53
      %p55 = scmp.ne.s32.totalorder %s41, %s42
      %p56 = scmp.eq.s32.totalorder %s34, 1
      %p57 = por %p55, %p56
      %p59 = scmp.ne.s32.totalorder %s42, %s58
      %p60 = scmp.eq.s32.totalorder %s34, 0
      %p61 = por %p59, %p60
      %s62 = ssub.s32 %s28, %s35
      %p63 = scmp.eq.s32.totalorder %s62, 0
      %s65 = sadd.s32 %s64, 1
      %s66 = scalar_select %p63, %s64, %s65
      %p69 = pneg %p63
      %p70 = scmp.eq.s32.totalorder %s28, 1
      %p71 = por %p69, %p70
      %p72 = scmp.ne.s32.totalorder %s64, %s67
      %p73 = scmp.eq.s32.totalorder %s28, 0
      %p74 = por %p72, %p73
      %p75 = scmp.ne.s32.totalorder %s64, %s67
      %p76 = scmp.eq.s32.totalorder %s33, 1
      %p77 = por %p75, %p76
      %p78 = scmp.ne.s32.totalorder %s67, %s68
      %p79 = scmp.eq.s32.totalorder %s33, 0
      %p80 = por %p78, %p79
      %p81 = scmp.ne.s32.totalorder %s67, %s68
      %p82 = scmp.eq.s32.totalorder %s34, 1
      %p83 = por %p81, %p82
      %p85 = scmp.ne.s32.totalorder %s68, %s84
      %p86 = scmp.eq.s32.totalorder %s34, 0
      %p87 = por %p85, %p86
      %s88 = ssub.s32 %s28, %s35
      %p89 = scmp.eq.s32.totalorder %s88, 0
      %s91 = sadd.s32 %s90, 1
      %s92 = scalar_select %p89, %s90, %s91
      %p95 = pneg %p89
      %p96 = scmp.eq.s32.totalorder %s28, 1
      %p97 = por %p95, %p96
      %p98 = scmp.ne.s32.totalorder %s90, %s93
      %p99 = scmp.eq.s32.totalorder %s28, 0
      %p100 = por %p98, %p99
      %p101 = scmp.ne.s32.totalorder %s90, %s93
      %p102 = scmp.eq.s32.totalorder %s33, 1
      %p103 = por %p101, %p102
      %p104 = scmp.ne.s32.totalorder %s93, %s94
      %p105 = scmp.eq.s32.totalorder %s33, 0
      %p106 = por %p104, %p105
      %p107 = scmp.ne.s32.totalorder %s93, %s94
      %p108 = scmp.eq.s32.totalorder %s34, 1
      %p109 = por %p107, %p108
      %p111 = scmp.ne.s32.totalorder %s94, %s110
      %p112 = scmp.eq.s32.totalorder %s34, 0
      %p113 = por %p111, %p112
      %s115 = sadd.s32 %s114, 1
      %p118 = scmp.eq.s32.totalorder %s28, 1
      %p119 = scmp.ne.s32.totalorder %s114, %s116
      %p120 = scmp.eq.s32.totalorder %s28, 0
      %p121 = por %p119, %p120
      %p122 = scmp.ne.s32.totalorder %s114, %s116
      %p123 = scmp.eq.s32.totalorder %s33, 1
      %p124 = por %p122, %p123
      %p125 = scmp.ne.s32.totalorder %s116, %s117
      %p126 = scmp.eq.s32.totalorder %s33, 0
      %p127 = por %p125, %p126
      %p128 = scmp.ne.s32.totalorder %s116, %s117
      %p129 = scmp.eq.s32.totalorder %s34, 1
      %p130 = por %p128, %p129
      %p132 = scmp.ne.s32.totalorder %s117, %s131
      %p133 = scmp.eq.s32.totalorder %s34, 0
      %p134 = por %p132, %p133
      %s136 = sadd.s32 %s135, 1
      %p139 = scmp.eq.s32.totalorder %s28, 1
      %p140 = scmp.ne.s32.totalorder %s135, %s137
      %p141 = scmp.eq.s32.totalorder %s28, 0
      %p142 = por %p140, %p141
      %p143 = scmp.ne.s32.totalorder %s135, %s137
      %p144 = scmp.eq.s32.totalorder %s33, 1
      %p145 = por %p143, %p144
      %p146 = scmp.ne.s32.totalorder %s137, %s138
      %p147 = scmp.eq.s32.totalorder %s33, 0
      %p148 = por %p146, %p147
      %p149 = scmp.ne.s32.totalorder %s137, %s138
      %p150 = scmp.eq.s32.totalorder %s34, 1
      %p151 = por %p149, %p150
      %p153 = scmp.ne.s32.totalorder %s138, %s152
      %p154 = scmp.eq.s32.totalorder %s34, 0
      %p155 = por %p153, %p154
      %s157 = sadd.s32 %s156, 1
      %p160 = scmp.eq.s32.totalorder %s28, 1
      %p161 = scmp.ne.s32.totalorder %s156, %s158
      %p162 = scmp.eq.s32.totalorder %s28, 0
      %p163 = por %p161, %p162
      %p164 = scmp.ne.s32.totalorder %s156, %s158
      %p165 = scmp.eq.s32.totalorder %s33, 1
      %p166 = por %p164, %p165
      %p167 = scmp.ne.s32.totalorder %s158, %s159
      %p168 = scmp.eq.s32.totalorder %s33, 0
      %p169 = por %p167, %p168
      %p170 = scmp.ne.s32.totalorder %s158, %s159
      %p171 = scmp.eq.s32.totalorder %s34, 1
      %p172 = por %p170, %p171
      %p174 = scmp.ne.s32.totalorder %s159, %s173
      %p175 = scmp.eq.s32.totalorder %s34, 0
      %p176 = por %p174, %p175
      %s177 = ssub.s32 %s28, %s35
      %p178 = scmp.eq.s32.totalorder %s177, 0
      %s180 = sadd.s32 %s179, 1
      %s181 = scalar_select %p178, %s179, %s180
      %p184 = pneg %p178
      %p185 = scmp.eq.s32.totalorder %s28, 1
      %p186 = por %p184, %p185
      %p187 = scmp.ne.s32.totalorder %s179, %s182
      %p188 = scmp.eq.s32.totalorder %s28, 0
      %p189 = por %p187, %p188
      %p190 = scmp.ne.s32.totalorder %s179, %s182
      %p191 = scmp.eq.s32.totalorder %s33, 1
      %p192 = por %p190, %p191
      %p193 = scmp.ne.s32.totalorder %s182, %s183
      %p194 = scmp.eq.s32.totalorder %s33, 0
      %p195 = por %p193, %p194
      %p196 = scmp.ne.s32.totalorder %s182, %s183
      %p197 = scmp.eq.s32.totalorder %s34, 1
      %p198 = por %p196, %p197
      %p200 = scmp.ne.s32.totalorder %s183, %s199
      %p201 = scmp.eq.s32.totalorder %s34, 0
      %p202 = por %p200, %p201
      %s203 = ssub.s32 %s28, %s35
      %p204 = scmp.eq.s32.totalorder %s203, 0
      %s206 = sadd.s32 %s205, 1
      %s207 = scalar_select %p204, %s205, %s206
      %p210 = pneg %p204
      %p211 = scmp.eq.s32.totalorder %s28, 1
      %p212 = por %p210, %p211
      %p213 = scmp.ne.s32.totalorder %s205, %s208
      %p214 = scmp.eq.s32.totalorder %s28, 0
      %p215 = por %p213, %p214
      %p216 = scmp.ne.s32.totalorder %s205, %s208
      %p217 = scmp.eq.s32.totalorder %s33, 1
      %p218 = por %p216, %p217
      %p219 = scmp.ne.s32.totalorder %s208, %s209
      %p220 = scmp.eq.s32.totalorder %s33, 0
      %p221 = por %p219, %p220
      %p222 = scmp.ne.s32.totalorder %s208, %s209
      %p223 = scmp.eq.s32.totalorder %s34, 1
      %p224 = por %p222, %p223
      %p226 = scmp.ne.s32.totalorder %s209, %s225
      %p227 = scmp.eq.s32.totalorder %s34, 0
      %p228 = por %p226, %p227
      %p229 = scmp.le.s32.totalorder 1, %s28
      %p230 = scmp.lt.s32.totalorder %s28, 3
      %p231 = pnand %p229, %p230
      %p232 = pneg %p231
      // Predicated region
      $region9: #{tpu_custom_call.1} parent=5 // pred_check
        _
      $region10: #{tpu_custom_call.1} parent=5 // pred_check_branch
        %234 = sbr.rel (%p231) target = $region12
      $region11: #{tpu_custom_call.1} parent=5 // pred_region
        %s235 = ssub.s32 %s28, 1
        // Predicated region
        $region13: #{tpu_custom_call.1} parent=11 // pred_check
          %p236 = pneg %p127
        $region14: #{tpu_custom_call.1} parent=11 // pred_check_branch
          %238 = sbr.rel (%p236) target = $region16
        $region15: #{tpu_custom_call.1} parent=11 // pred_region
          %s240 = ssub.s32 2048, 2048
          %241 = vsyncadd [#allocation9], %s240
          %s242 = sshll.u32 [#allocation8], 4
          %s243 = int_to_ptr.vmem [resolvable:$true] %s242
          %248 = dma.hbm_to_vmem [thread:$0]  %s3, 2048, %s243, [#allocation9], 128, 128, 8
        $region16: #{tpu_custom_call.1} parent=11 // pred_fallthru
          _
        // Predicated region
        $region17: #{tpu_custom_call.1} parent=11 // pred_check
          %p249 = pneg %p148
        $region18: #{tpu_custom_call.1} parent=11 // pred_check_branch
          %251 = sbr.rel (%p249) target = $region20
        $region19: #{tpu_custom_call.1} parent=11 // pred_region
          %s253 = ssub.s32 16, 16
          %254 = vsyncadd [#allocation9], %s253
          %s256 = sshll.u32 [#allocation10], 4
          %s257 = int_to_ptr.vmem [resolvable:$true] %s256
          %259 = dma.hbm_to_vmem [thread:$0]  %s4, 16, %s257, [#allocation9]
        $region20: #{tpu_custom_call.1} parent=11 // pred_fallthru
          _
        // Predicated region
        $region21: #{tpu_custom_call.1} parent=11 // pred_check
          %p260 = pneg %p169
        $region22: #{tpu_custom_call.1} parent=11 // pred_check_branch
          %262 = sbr.rel (%p260) target = $region24
        $region23: #{tpu_custom_call.1} parent=11 // pred_region
          %s264 = ssub.s32 16, 16
          %265 = vsyncadd [#allocation12], %s264
          %s267 = sshll.u32 [#allocation11], 4
          %s268 = int_to_ptr.vmem [resolvable:$true] %s267
          %270 = dma.hbm_to_vmem [thread:$0]  %s5, 16, %s268, [#allocation12]
        $region24: #{tpu_custom_call.1} parent=11 // pred_fallthru
          _
      $region12: #{tpu_custom_call.1} parent=5 // pred_fallthru
        _
      %p271 = scmp.lt.s32.totalorder %s28, 2
      // Predicated region
      $region25: #{tpu_custom_call.1} parent=5 // pred_check
        %p272 = pneg %p271
      $region26: #{tpu_custom_call.1} parent=5 // pred_check_branch
        %274 = sbr.rel (%p272) target = $region28
      $region27: #{tpu_custom_call.1} parent=5 // pred_region
        // Predicated region
        $region29: #{tpu_custom_call.1} parent=27 // pred_check
          %p275 = pneg %p48
        $region30: #{tpu_custom_call.1} parent=27 // pred_check_branch
          %277 = sbr.rel (%p275) target = $region32
        $region31: #{tpu_custom_call.1} parent=27 // pred_region
          %s278 = sand.u32 %s38, 1
          %s279 = scalar_lea.sflag [#allocation3], %s278
          %s280 = sand.u32 %s38, 1
          %s281 = scalar_lea.vmem [#allocation2], %s280
          %s283 = ssub.s32 16, 16
          %284 = vsyncadd %s279, %s283
          %s285 = smul.addr %s28, 16
          %s286 = scalar_lea.hbm %s0, %s285
          %s288 = sshll.u32 %s281, 4
          %s289 = int_to_ptr.vmem [resolvable:$true] %s288
          %291 = dma.hbm_to_vmem [thread:$0]  %s286, 16, %s289, %s279
        $region32: #{tpu_custom_call.1} parent=27 // pred_fallthru
          _
        // Predicated region
        $region33: #{tpu_custom_call.1} parent=27 // pred_check
          %p292 = pneg %p74
        $region34: #{tpu_custom_call.1} parent=27 // pred_check_branch
          %294 = sbr.rel (%p292) target = $region36
        $region35: #{tpu_custom_call.1} parent=27 // pred_region
          %s295 = sand.u32 %s28, 1
          %s296 = scalar_lea.sflag [#allocation6], %s295
          %s297 = sand.u32 %s64, 1
          %s298 = smul.addr %s297, 8
          %s299 = scalar_lea.vmem [#allocation5], %s298
          %s301 = ssub.s32 128, 128
          %302 = vsyncadd %s296, %s301
          %s303 = smul.addr %s28, 128
          %s304 = scalar_lea.hbm %s1, %s303
          %s306 = sshll.u32 %s299, 4
          %s307 = int_to_ptr.vmem [resolvable:$true] %s306
          %309 = dma.hbm_to_vmem [thread:$0]  %s304, 128, %s307, %s296
        $region36: #{tpu_custom_call.1} parent=27 // pred_fallthru
          _
        // Predicated region
        $region37: #{tpu_custom_call.1} parent=27 // pred_check
          %p310 = pneg %p100
        $region38: #{tpu_custom_call.1} parent=27 // pred_check_branch
          %312 = sbr.rel (%p310) target = $region40
        $region39: #{tpu_custom_call.1} parent=27 // pred_region
          %s313 = sand.u32 %s28, 1
          %s314 = scalar_lea.sflag [#allocation6], %s313
          %s315 = sand.u32 %s90, 1
          %s316 = scalar_lea.vmem [#allocation7], %s315
          %s318 = ssub.s32 16, 16
          %319 = vsyncadd %s314, %s318
          %s320 = smul.addr %s28, 16
          %s321 = scalar_lea.hbm %s2, %s320
          %s323 = sshll.u32 %s316, 4
          %s324 = int_to_ptr.vmem [resolvable:$true] %s323
          %326 = dma.hbm_to_vmem [thread:$0]  %s321, 16, %s324, %s314
        $region40: #{tpu_custom_call.1} parent=27 // pred_fallthru
          _
      $region28: #{tpu_custom_call.1} parent=5 // pred_fallthru
        _
      %p327 = scmp.le.s32.totalorder 1, %s28
      %p328 = scmp.lt.s32.totalorder %s28, 3
      %p329 = pnand %p327, %p328
      %p330 = pneg %p329
      // Predicated region
      $region41: #{tpu_custom_call.1} parent=5 // pred_check
        _
      $region42: #{tpu_custom_call.1} parent=5 // pred_check_branch
        %332 = sbr.rel (%p329) target = $region44
      $region43: #{tpu_custom_call.1} parent=5 // pred_region
        %s333 = ssub.s32 %s28, 1
        %s334 = sand.u32 %s41, 1
        %s335 = scalar_lea.sflag [#allocation3], %s334
        %s336 = sand.u32 %s41, 1
        %s337 = scalar_lea.vmem [#allocation2], %s336
        // Predicated region
        $region45: #{tpu_custom_call.1} parent=43 // pred_check
          %p338 = pneg %p54
        $region46: #{tpu_custom_call.1} parent=43 // pred_check_branch
          %340 = sbr.rel (%p338) target = $region48
        $region47: #{tpu_custom_call.1} parent=43 // pred_region
          %341 = dma.done %s335, 16
        $region48: #{tpu_custom_call.1} parent=43 // pred_fallthru
          _
        %s342 = sand.u32 %s33, 1
        %s343 = scalar_lea.sflag [#allocation6], %s342
        %s344 = sand.u32 %s67, 1
        %s345 = smul.addr %s344, 8
        %s346 = scalar_lea.vmem [#allocation5], %s345
        // Predicated region
        $region49: #{tpu_custom_call.1} parent=43 // pred_check
          %p347 = pneg %p80
        $region50: #{tpu_custom_call.1} parent=43 // pred_check_branch
          %349 = sbr.rel (%p347) target = $region52
        $region51: #{tpu_custom_call.1} parent=43 // pred_region
          %350 = dma.done %s343, 128
        $region52: #{tpu_custom_call.1} parent=43 // pred_fallthru
          _
        %s351 = sand.u32 %s33, 1
        %s352 = scalar_lea.sflag [#allocation6], %s351
        %s353 = sand.u32 %s93, 1
        %s354 = scalar_lea.vmem [#allocation7], %s353
        // Predicated region
        $region53: #{tpu_custom_call.1} parent=43 // pred_check
          %p355 = pneg %p106
        $region54: #{tpu_custom_call.1} parent=43 // pred_check_branch
          %357 = sbr.rel (%p355) target = $region56
        $region55: #{tpu_custom_call.1} parent=43 // pred_region
          %358 = dma.done %s352, 16
        $region56: #{tpu_custom_call.1} parent=43 // pred_fallthru
          _
        // Predicated region
        $region57: #{tpu_custom_call.1} parent=43 // pred_check
          %p359 = pneg %p127
        $region58: #{tpu_custom_call.1} parent=43 // pred_check_branch
          %361 = sbr.rel (%p359) target = $region60
        $region59: #{tpu_custom_call.1} parent=43 // pred_region
          %362 = dma.done [#allocation9], 2048
        $region60: #{tpu_custom_call.1} parent=43 // pred_fallthru
          _
        // Predicated region
        $region61: #{tpu_custom_call.1} parent=43 // pred_check
          %p363 = pneg %p148
        $region62: #{tpu_custom_call.1} parent=43 // pred_check_branch
          %365 = sbr.rel (%p363) target = $region64
        $region63: #{tpu_custom_call.1} parent=43 // pred_region
          %366 = dma.done [#allocation9], 16
        $region64: #{tpu_custom_call.1} parent=43 // pred_fallthru
          _
        // Predicated region
        $region65: #{tpu_custom_call.1} parent=43 // pred_check
          %p367 = pneg %p169
        $region66: #{tpu_custom_call.1} parent=43 // pred_check_branch
          %369 = sbr.rel (%p367) target = $region68
        $region67: #{tpu_custom_call.1} parent=43 // pred_region
          %370 = dma.done [#allocation12], 16
        $region68: #{tpu_custom_call.1} parent=43 // pred_fallthru
          _
        %s371 = sand.u32 %s41, 1
        %s372 = scalar_lea.sflag [#allocation3], %s371
        %s373 = sand.u32 %s41, 1
        %s374 = scalar_lea.vmem [#allocation2], %s373
        %p375 = pneg %p54
        %p376 = pneg %p51
        %s377 = sand.u32 %s33, 1
        %s378 = scalar_lea.sflag [#allocation6], %s377
        %s379 = sand.u32 %s67, 1
        %s380 = smul.addr %s379, 8
        %s381 = scalar_lea.vmem [#allocation5], %s380
        %p382 = pneg %p80
        %p383 = pneg %p77
        %s384 = sand.u32 %s33, 1
        %s385 = scalar_lea.sflag [#allocation6], %s384
        %s386 = sand.u32 %s93, 1
        %s387 = scalar_lea.vmem [#allocation7], %s386
        %p388 = pneg %p106
        %p389 = pneg %p103
        %p390 = pneg %p127
        %p391 = pneg %p124
        %p392 = pneg %p148
        %p393 = pneg %p145
        %p394 = pneg %p169
        %p395 = pneg %p166
        %p396 = pneg %p195
        %p397 = pneg %p192
        %s398 = sand.u32 %s182, 1
        %s399 = scalar_lea.sflag [#allocation4], %s398
        %s400 = sand.u32 %s182, 1
        %s401 = scalar_lea.vmem [#allocation13], %s400
        %p402 = pneg %p221
        %p403 = pneg %p218
        %s404 = sand.u32 %s208, 1
        %s405 = scalar_lea.sflag [#allocation15], %s404
        %s406 = sand.u32 %s208, 1
        %s407 = scalar_lea.vmem [#allocation14], %s406
        %v408 = vld [vmem:[%s346] sm:$0xff]
        %v409 = vld [vmem:[#allocation8] sm:$0xff]
        %v410 = vld [vmem:[#allocation8 + $0x8] sm:$0xff]
        %v411 = vld [vmem:[#allocation8 + $0x10] sm:$0xff]
        %v412 = vld [vmem:[#allocation8 + $0x18] sm:$0xff]
        %v413 = vld [vmem:[#allocation8 + $0x20] sm:$0xff]
        %v414 = vld [vmem:[#allocation8 + $0x28] sm:$0xff]
        %v415 = vld [vmem:[#allocation8 + $0x30] sm:$0xff]
        %v416 = vld [vmem:[#allocation8 + $0x38] sm:$0xff]
        %v417 = vld [vmem:[#allocation8 + $0x40] sm:$0xff]
        %v418 = vld [vmem:[#allocation8 + $0x48] sm:$0xff]
        %v419 = vld [vmem:[#allocation8 + $0x50] sm:$0xff]
        %v420 = vld [vmem:[#allocation8 + $0x58] sm:$0xff]
        %v421 = vld [vmem:[#allocation8 + $0x60] sm:$0xff]
        %v422 = vld [vmem:[#allocation8 + $0x68] sm:$0xff]
        %v423 = vld [vmem:[#allocation8 + $0x70] sm:$0xff]
        %v424 = vld [vmem:[#allocation8 + $0x78] sm:$0xff]
        %425 = vmatprep.subr.mxu0 0.0
        %426 = vmatpush1.msra.mxu0 %v409
        %427 = vmatprep.subr.mxu0 0.0
        %428 = vmatpush1.msra.mxu0 %v410
        %429 = vmatprep.subr.mxu0 0.0
        %430 = vmatpush1.msra.mxu0 %v411
        %431 = vmatprep.subr.mxu0 0.0
        %432 = vmatpush1.msra.mxu0 %v412
        %433 = vmatprep.subr.mxu0 0.0
        %434 = vmatpush1.msra.mxu0 %v413
        %435 = vmatprep.subr.mxu0 0.0
        %436 = vmatpush1.msra.mxu0 %v414
        %437 = vmatprep.subr.mxu0 0.0
        %438 = vmatpush1.msra.mxu0 %v415
        %439 = vmatprep.subr.mxu0 0.0
        %440 = vmatpush1.msra.mxu0 %v416
        %441 = vmatprep.subr.mxu0 0.0
        %442 = vmatpush1.msra.mxu0 %v417
        %443 = vmatprep.subr.mxu0 0.0
        %444 = vmatpush1.msra.mxu0 %v418
        %445 = vmatprep.subr.mxu0 0.0
        %446 = vmatpush1.msra.mxu0 %v419
        %447 = vmatprep.subr.mxu0 0.0
        %448 = vmatpush1.msra.mxu0 %v420
        %449 = vmatprep.subr.mxu0 0.0
        %450 = vmatpush1.msra.mxu0 %v421
        %451 = vmatprep.subr.mxu0 0.0
        %452 = vmatpush1.msra.mxu0 %v422
        %453 = vmatprep.subr.mxu0 0.0
        %454 = vmatpush1.msra.mxu0 %v423
        %455 = vmatprep.subr.mxu0 0.0
        %456 = vmatpush1.msra.mxu0 %v424
        %457 = vmatprep.subr.mxu0 0.0
        %458 = vmatpush1.msra.mxu0 0.0
        %459 = vmatprep.subr.mxu0 0.0
        %460 = vmatpush1.msra.mxu0 0.0
        %461 = vmatprep.subr.mxu0 0.0
        %462 = vmatpush1.msra.mxu0 0.0
        %463 = vmatprep.subr.mxu0 0.0
        %464 = vmatpush1.msra.mxu0 0.0
        %465 = vmatprep.subr.mxu0 0.0
        %466 = vmatpush1.msra.mxu0 0.0
        %467 = vmatprep.subr.mxu0 0.0
        %468 = vmatpush1.msra.mxu0 0.0
        %469 = vmatprep.subr.mxu0 0.0
        %470 = vmatpush1.msra.mxu0 0.0
        %471 = vmatprep.subr.mxu0 0.0
        %472 = vmatpush1.msra.mxu0 0.0
        %473 = vmatprep.subr.mxu0 0.0
        %474 = vmatpush1.msra.mxu0 0.0
        %475 = vmatprep.subr.mxu0 0.0
        %476 = vmatpush1.msra.mxu0 0.0
        %477 = vmatprep.subr.mxu0 0.0
        %478 = vmatpush1.msra.mxu0 0.0
        %479 = vmatprep.subr.mxu0 0.0
        %480 = vmatpush1.msra.mxu0 0.0
        %481 = vmatprep.subr.mxu0 0.0
        %482 = vmatpush1.msra.mxu0 0.0
        %483 = vmatprep.subr.mxu0 0.0
        %484 = vmatpush1.msra.mxu0 0.0
        %485 = vmatprep.subr.mxu0 0.0
        %486 = vmatpush1.msra.mxu0 0.0
        %487 = vmatprep.subr.mxu0 0.0
        %488 = vmatpush1.msra.mxu0 0.0
        %489 = vmatprep.mubr.f32.mxu0 0.0
        %490 = vmatmul.mubr.f32.gmra.mrb[0].mxu0 %v408
        %v491 = vpop.f32.mrb[0].mxu0
        %v492 = vadd.f32 0.0, %v491
        %v493 = vpop.f32.mrb[0].mxu0
        %494 = vdwg.mxu0
        %v495 = vld [vmem:[#allocation10] sm:$0x1]
        %v497 = vlaneseq
        %v498 = vshrl.u32 %v497, 7
        %v499 = vsub.s32 0, %v498
        %v500 = vrot.slane %v495, %v499
        %v502 = vadd.f32 %v492, %v500
        %v503 = vld [vmem:[%s337] sm:$0x1]
        %v505 = vlaneseq
        %v506 = vshrl.u32 %v505, 7
        %v507 = vsub.s32 0, %v506
        %v508 = vrot.slane %v503, %v507
        %v510 = vadd.f32 %v508, %v502
        %v511 = vtanh.pop %v510
        %v512 = vld [vmem:[#allocation11] sm:$0x1]
        %v513 = vld [vmem:[%s354] sm:$0x1]
        %514 = vmatprep.subr.mxu0 0.0
        %515 = vmatpush1.xpose.msra.mxu0 %v511
        %516 = vmatprep.subr.mxu0 0.0
        %517 = vmatpush1.xpose.msra.mxu0 0.0
        %518 = vmatprep.subr.mxu0 0.0
        %519 = vmatpush1.xpose.msra.mxu0 0.0
        %520 = vmatprep.subr.mxu0 0.0
        %521 = vmatpush1.xpose.msra.mxu0 0.0
        %522 = vmatprep.subr.mxu0 0.0
        %523 = vmatpush1.xpose.msra.mxu0 0.0
        %524 = vmatprep.subr.mxu0 0.0
        %525 = vmatpush1.xpose.msra.mxu0 0.0
        %526 = vmatprep.subr.mxu0 0.0
        %527 = vmatpush1.xpose.msra.mxu0 0.0
        %528 = vmatprep.subr.mxu0 0.0
        %529 = vmatpush1.xpose.msra.mxu0 0.0
        %530 = vmatprep.subr.mxu0 0.0
        %531 = vmatpush1.xpose.msra.mxu0 0.0
        %532 = vmatprep.subr.mxu0 0.0
        %533 = vmatpush1.xpose.msra.mxu0 0.0
        %534 = vmatprep.subr.mxu0 0.0
        %535 = vmatpush1.xpose.msra.mxu0 0.0
        %536 = vmatprep.subr.mxu0 0.0
        %537 = vmatpush1.xpose.msra.mxu0 0.0
        %538 = vmatprep.subr.mxu0 0.0
        %539 = vmatpush1.xpose.msra.mxu0 0.0
        %540 = vmatprep.subr.mxu0 0.0
        %541 = vmatpush1.xpose.msra.mxu0 0.0
        %542 = vmatprep.subr.mxu0 0.0
        %543 = vmatpush1.xpose.msra.mxu0 0.0
        %544 = vmatprep.subr.mxu0 0.0
        %545 = vmatpush1.xpose.msra.mxu0 0.0
        %546 = vmatprep.subr.mxu0 0.0
        %547 = vmatpush1.xpose.msra.mxu0 0.0
        %548 = vmatprep.subr.mxu0 0.0
        %549 = vmatpush1.xpose.msra.mxu0 0.0
        %550 = vmatprep.subr.mxu0 0.0
        %551 = vmatpush1.xpose.msra.mxu0 0.0
        %552 = vmatprep.subr.mxu0 0.0
        %553 = vmatpush1.xpose.msra.mxu0 0.0
        %554 = vmatprep.subr.mxu0 0.0
        %555 = vmatpush1.xpose.msra.mxu0 0.0
        %556 = vmatprep.subr.mxu0 0.0
        %557 = vmatpush1.xpose.msra.mxu0 0.0
        %558 = vmatprep.subr.mxu0 0.0
        %559 = vmatpush1.xpose.msra.mxu0 0.0
        %560 = vmatprep.subr.mxu0 0.0
        %561 = vmatpush1.xpose.msra.mxu0 0.0
        %562 = vmatprep.subr.mxu0 0.0
        %563 = vmatpush1.xpose.msra.mxu0 0.0
        %564 = vmatprep.subr.mxu0 0.0
        %565 = vmatpush1.xpose.msra.mxu0 0.0
        %566 = vmatprep.subr.mxu0 0.0
        %567 = vmatpush1.xpose.msra.mxu0 0.0
        %568 = vmatprep.subr.mxu0 0.0
        %569 = vmatpush1.xpose.msra.mxu0 0.0
        %570 = vmatprep.subr.mxu0 0.0
        %571 = vmatpush1.xpose.msra.mxu0 0.0
        %572 = vmatprep.subr.mxu0 0.0
        %573 = vmatpush1.xpose.msra.mxu0 0.0
        %574 = vmatprep.subr.mxu0 0.0
        %575 = vmatpush1.xpose.msra.mxu0 0.0
        %576 = vmatprep.subr.mxu0 0.0
        %577 = vmatpush1.xpose.msra.mxu0 0.0
        %578 = vmatprep.mubr.f32.mxu0 0.0
        %579 = vmatmul.mubr.f32.gmra.mrb[0].mxu0 %v512
        %v580 = vpop.f32.mrb[0].mxu0
        %v581 = vadd.f32 %v513, %v580
        %v582 = vpop.f32.mrb[0].mxu0
        %583 = vdwg.mxu0
        %vm584 = vcmask 57344
        %v585 = vsel %vm584, %v581, -inf
        %586 = vmax.xlane.f32.xlu0 %v585
        %v587 = vpop.xlane.xlu0 %586
        %v588 = vsub.f32 %v581, %v587
        %v589 = vmul.f32 %v588, 1.442695
        %v590 = vpow.pop %v589
        %v591 = vsel %vm584, %v590, 0.0
        %592 = vadd.xlane.f32.xlu0 %v591
        %v593 = vpop.xlane.xlu0 %592
        %v594 = vrcp.pop %v593
        %v595 = vmul.f32 %v590, %v594
        %596 = vst.msk [vmem:[%s407] sm:$0x1] %vm584, %v595
        %vm597 = vcmask 64512
        %v599 = vsel %vm597, %v595, 0
        %601 = vmatprep.subr.mxu0 0.0
        %602 = vmatpush1.msra.mxu0 %v502
        %603 = vmatprep.subr.mxu0 0.0
        %604 = vmatpush1.msra.mxu0 0.0
        %605 = vmatprep.subr.mxu0 0.0
        %606 = vmatpush1.msra.mxu0 0.0
        %607 = vmatprep.subr.mxu0 0.0
        %608 = vmatpush1.msra.mxu0 0.0
        %609 = vmatprep.subr.mxu0 0.0
        %610 = vmatpush1.msra.mxu0 0.0
        %611 = vmatprep.subr.mxu0 0.0
        %612 = vmatpush1.msra.mxu0 0.0
        %613 = vmatprep.subr.mxu0 0.0
        %614 = vmatpush1.msra.mxu0 0.0
        %615 = vmatprep.subr.mxu0 0.0
        %616 = vmatpush1.msra.mxu0 0.0
        %617 = vmatprep.subr.mxu0 0.0
        %618 = vmatpush1.msra.mxu0 0.0
        %619 = vmatprep.subr.mxu0 0.0
        %620 = vmatpush1.msra.mxu0 0.0
        %621 = vmatprep.subr.mxu0 0.0
        %622 = vmatpush1.msra.mxu0 0.0
        %623 = vmatprep.subr.mxu0 0.0
        %624 = vmatpush1.msra.mxu0 0.0
        %625 = vmatprep.subr.mxu0 0.0
        %626 = vmatpush1.msra.mxu0 0.0
        %627 = vmatprep.subr.mxu0 0.0
        %628 = vmatpush1.msra.mxu0 0.0
        %629 = vmatprep.subr.mxu0 0.0
        %630 = vmatpush1.msra.mxu0 0.0
        %631 = vmatprep.subr.mxu0 0.0
        %632 = vmatpush1.msra.mxu0 0.0
        %633 = vmatprep.subr.mxu0 0.0
        %634 = vmatpush1.msra.mxu0 0.0
        %635 = vmatprep.subr.mxu0 0.0
        %636 = vmatpush1.msra.mxu0 0.0
        %637 = vmatprep.subr.mxu0 0.0
        %638 = vmatpush1.msra.mxu0 0.0
        %639 = vmatprep.subr.mxu0 0.0
        %640 = vmatpush1.msra.mxu0 0.0
        %641 = vmatprep.subr.mxu0 0.0
        %642 = vmatpush1.msra.mxu0 0.0
        %643 = vmatprep.subr.mxu0 0.0
        %644 = vmatpush1.msra.mxu0 0.0
        %645 = vmatprep.subr.mxu0 0.0
        %646 = vmatpush1.msra.mxu0 0.0
        %647 = vmatprep.subr.mxu0 0.0
        %648 = vmatpush1.msra.mxu0 0.0
        %649 = vmatprep.subr.mxu0 0.0
        %650 = vmatpush1.msra.mxu0 0.0
        %651 = vmatprep.subr.mxu0 0.0
        %652 = vmatpush1.msra.mxu0 0.0
        %653 = vmatprep.subr.mxu0 0.0
        %654 = vmatpush1.msra.mxu0 0.0
        %655 = vmatprep.subr.mxu0 0.0
        %656 = vmatpush1.msra.mxu0 0.0
        %657 = vmatprep.subr.mxu0 0.0
        %658 = vmatpush1.msra.mxu0 0.0
        %659 = vmatprep.subr.mxu0 0.0
        %660 = vmatpush1.msra.mxu0 0.0
        %661 = vmatprep.subr.mxu0 0.0
        %662 = vmatpush1.msra.mxu0 0.0
        %663 = vmatprep.subr.mxu0 0.0
        %664 = vmatpush1.msra.mxu0 0.0
        %665 = vmatprep.mubr.f32.mxu0 0.0
        %666 = vmatmul.mubr.f32.gmra.mrb[0].mxu0 %v599
        %v667 = vpop.f32.mrb[0].mxu0
        %v668 = vadd.f32 0.0, %v667
        %v669 = vpop.f32.mrb[0].mxu0
        %670 = vdwg.mxu0
        %671 = vst [vmem:[%s401] sm:$0x1] %v668
        %s672 = sand.u32 %s182, 1
        %s673 = scalar_lea.sflag [#allocation4], %s672
        %s674 = sand.u32 %s182, 1
        %s675 = scalar_lea.vmem [#allocation13], %s674
        %s676 = sand.u32 %s208, 1
        %s677 = scalar_lea.sflag [#allocation15], %s676
        %s678 = sand.u32 %s208, 1
        %s679 = scalar_lea.vmem [#allocation14], %s678
        // Predicated region
        $region69: #{tpu_custom_call.1} parent=43 // pred_check
          %p680 = pneg %p192
        $region70: #{tpu_custom_call.1} parent=43 // pred_check_branch
          %682 = sbr.rel (%p680) target = $region72
        $region71: #{tpu_custom_call.1} parent=43 // pred_region
          %s684 = ssub.s32 16, 16
          %685 = vsyncadd %s673, %s684
          %s686 = smul.addr %s33, 16
          %s687 = scalar_lea.hbm %s6, %s686
          %s689 = sshll.u32 %s675, 4
          %s690 = int_to_ptr.vmem [resolvable:$true] %s689
          %692 = dma.vmem_to_hbm [thread:$0]  %s690, 16, %s687, %s673
        $region72: #{tpu_custom_call.1} parent=43 // pred_fallthru
          _
        // Predicated region
        $region73: #{tpu_custom_call.1} parent=43 // pred_check
          %p693 = pneg %p218
        $region74: #{tpu_custom_call.1} parent=43 // pred_check_branch
          %695 = sbr.rel (%p693) target = $region76
        $region75: #{tpu_custom_call.1} parent=43 // pred_region
          %s697 = ssub.s32 16, 16
          %698 = vsyncadd %s677, %s697
          %s699 = smul.addr %s33, 16
          %s700 = scalar_lea.hbm %s7, %s699
          %s702 = sshll.u32 %s679, 4
          %s703 = int_to_ptr.vmem [resolvable:$true] %s702
          %705 = dma.vmem_to_hbm [thread:$0]  %s703, 16, %s700, %s677
        $region76: #{tpu_custom_call.1} parent=43 // pred_fallthru
          _
      $region44: #{tpu_custom_call.1} parent=5 // pred_fallthru
        _
      %p706 = scmp.le.s32.totalorder 2, %s28
      // Predicated region
      $region77: #{tpu_custom_call.1} parent=5 // pred_check
        %p707 = pneg %p706
      $region78: #{tpu_custom_call.1} parent=5 // pred_check_branch
        %709 = sbr.rel (%p707) target = $region80
      $region79: #{tpu_custom_call.1} parent=5 // pred_region
        %s710 = ssub.s32 %s28, 2
        // Predicated region
        $region81: #{tpu_custom_call.1} parent=79 // pred_check
          %p711 = pneg %p198
        $region82: #{tpu_custom_call.1} parent=79 // pred_check_branch
          %713 = sbr.rel (%p711) target = $region84
        $region83: #{tpu_custom_call.1} parent=79 // pred_region
          %s714 = sand.u32 %s183, 1
          %s715 = scalar_lea.sflag [#allocation4], %s714
          %s716 = sand.u32 %s183, 1
          %s717 = scalar_lea.vmem [#allocation13], %s716
          %718 = dma.done %s715, 16
        $region84: #{tpu_custom_call.1} parent=79 // pred_fallthru
          _
        // Predicated region
        $region85: #{tpu_custom_call.1} parent=79 // pred_check
          %p719 = pneg %p224
        $region86: #{tpu_custom_call.1} parent=79 // pred_check_branch
          %721 = sbr.rel (%p719) target = $region88
        $region87: #{tpu_custom_call.1} parent=79 // pred_region
          %s722 = sand.u32 %s209, 1
          %s723 = scalar_lea.sflag [#allocation15], %s722
          %s724 = sand.u32 %s209, 1
          %s725 = scalar_lea.vmem [#allocation14], %s724
          %726 = dma.done %s723, 16
        $region88: #{tpu_custom_call.1} parent=79 // pred_fallthru
          _
      $region80: #{tpu_custom_call.1} parent=5 // pred_fallthru
        _
    $region6: #{tpu_custom_call.1} parent=1 // loop_footer
      %s32 = sadd.s32 1, %s28
    $region7: #{tpu_custom_call.1} parent=1 // loop_footer_branch
      %27 = sbr.rel target = $region3
    $region8: #{tpu_custom_call.1} parent=1 // loop_exit
      _
    %727 = vsyncpa [#allocation3], 1
    %s728 = scalar_lea.sflag [#allocation3], 1
    %729 = vsyncpa %s728, 1
    %730 = vsyncpa [#allocation6], 1
    %s731 = scalar_lea.sflag [#allocation6], 1
    %732 = vsyncpa %s731, 1
    %733 = vsyncpa [#allocation9], 1
    %734 = vsyncpa [#allocation12], 1
    %735 = vsyncpa [#allocation4], 1
    %s736 = scalar_lea.sflag [#allocation4], 1
    %737 = vsyncpa %s736, 1
    %738 = vsyncpa [#allocation15], 1
    %s739 = scalar_lea.sflag [#allocation15], 1
    %740 = vsyncpa %s739, 1

</llo_original>
